<compile_context>
chip_gen: v7x
topology: tpu7x:2x2x1
jax: 0.10.0
libtpu: 0.0.40
codegen_flags: <defaults>
</compile_context>

<pallas_src>
import jax
import jax.numpy as jnp
from jax.experimental import pallas as pl
from jax.experimental.pallas import tpu as pltpu

_LANE = 128
_DEFAULT_CHUNK_BYTES = 8 << 20     # ~8 MiB per DMA chunk for large slabs
_MAX_INFLIGHT = 4                  # concurrent HBM->HBM DMAs
_FASTPATH_MAX_BYTES = 1 << 10      # skip the kernel below this (tune up to ~1 MiB in prod)


def _whole_array_dma_kernel(in_ref, out_ref, sem):
    # Identity data path: single DMA descriptor, direct HBM -> HBM copy.
    cp = pltpu.make_async_copy(in_ref, out_ref, sem.at[0])
    cp.start()
    cp.wait()


def _make_chunked_dma_kernel(rows, chunk_rows, n_chunks, num_sems):
    """Large-slab path: several ~chunk-sized DMAs kept in flight concurrently."""

    def kernel(in_ref, out_ref, sems):
        def copy_for(c, slot):
            start = c * chunk_rows                      # static Python ints
            size = min(chunk_rows, rows - start)        # ragged last chunk
            return pltpu.make_async_copy(
                in_ref.at[pl.ds(start, size), :],
                out_ref.at[pl.ds(start, size), :],
                sems.at[slot],
            )

        # Keep up to `num_sems` DMAs in flight.
        for c in range(n_chunks):
            slot = c % num_sems
            if c >= num_sems:
                copy_for(c - num_sems, slot).wait()
            copy_for(c, slot).start()
        # Drain.
        for c in range(max(0, n_chunks - num_sems), n_chunks):
            copy_for(c, c % num_sems).wait()

    return kernel


def _dma_copy_whole(x):
    return pl.pallas_call(
        _whole_array_dma_kernel,
        out_shape=jax.ShapeDtypeStruct(x.shape, x.dtype),
        in_specs=[pl.BlockSpec(memory_space=pl.ANY)],
        out_specs=pl.BlockSpec(memory_space=pl.ANY),
        scratch_shapes=[pltpu.SemaphoreType.DMA((1,))],
    )(x)


def _dma_copy_chunked(x2d, chunk_rows):
    rows, lanes = x2d.shape
    n_chunks = pl.cdiv(rows, chunk_rows)
    num_sems = max(1, min(n_chunks, _MAX_INFLIGHT))
    kernel = _make_chunked_dma_kernel(rows, chunk_rows, n_chunks, num_sems)
    return pl.pallas_call(
        kernel,
        out_shape=jax.ShapeDtypeStruct((rows, lanes), x2d.dtype),
        in_specs=[pl.BlockSpec(memory_space=pl.ANY)],
        out_specs=pl.BlockSpec(memory_space=pl.ANY),
        scratch_shapes=[pltpu.SemaphoreType.DMA((num_sems,))],
    )(x2d)


def agent_workspace_roundtrip(x, *, force_kernel=False, chunk_bytes=_DEFAULT_CHUNK_BYTES):
    """Reproduces Agent.set(name, Agent.get(name)) on a workspace variable.

    Args:
        x: workspace variable, typically (T, B, D) (time, batch, feature).
        force_kernel: run the Pallas DMA kernel even for tiny slabs.
        chunk_bytes: per-DMA chunk size for large slabs.
    Returns:
        Array identical to x (same shape, dtype, values).
    """
    x = jnp.asarray(x)

    # Fast paths: scalars / empty / tiny slabs — dispatch would dwarf the copy,
    # and JAX arrays are immutable so returning x is a valid identity.
    if x.ndim == 0 or x.size == 0:
        return x
    nbytes = x.size * x.dtype.itemsize
    if not force_kernel and nbytes < _FASTPATH_MAX_BYTES:
        return x

    total = x.size
    itemsize = x.dtype.itemsize

    if nbytes <= chunk_bytes or total % _LANE != 0:
        # Single whole-array HBM->HBM DMA.  Also covers the non-%128 case:
        # no reshape/pad needed since nothing is staged through vregs.
        return _dma_copy_whole(x)

    # Large, lane-divisible slab: reshape to (rows, 128) and overlap multiple
    # chunk DMAs.  Chunk rows are a dtype-aware sublane multiple (f32:8,
    # bf16:16, int8:32) so chunk boundaries stay tile-aligned.
    rows = total // _LANE
    x2d = x.reshape(rows, _LANE)
    sublane_mult = max(1, (8 * 4) // itemsize)
    chunk_rows = (chunk_bytes // (_LANE * itemsize)) // sublane_mult * sublane_mult
    chunk_rows = max(sublane_mult, min(chunk_rows, rows))
    out2d = _dma_copy_chunked(x2d, chunk_rows)
    return out2d.reshape(x.shape)


class PallasAgent:
    """Minimal JAX-side mirror of bbrl Agent's name/workspace plumbing.

    The tensor hot path (get -> set round trip through the workspace) runs
    through the Pallas DMA kernel above.  forward() stays abstract, exactly
    like the PyTorch base class.
    """

    def __init__(self, name=None, verbose=False):
        self._name = name
        self.verbose = verbose
        self.workspace = None

    def set_name(self, n):
        self._name = n

    def get_name(self):
        return self._name

    def seed(self, seed):
        pass

    def get(self, index):
        if isinstance(index, str):
            return self.workspace[index]
        return self.workspace[index[0]][index[1]]

    def set(self, index, value):
        if isinstance(index, str):
            # Full-variable write path goes through the Pallas DMA kernel
            # (tiny/scalar variables short-circuit inside the wrapper).
            self.workspace[index] = agent_workspace_roundtrip(value)
        else:
            # TODO(synk): time-indexed write uses functional .at[t].set outside
            # the kernel (no Pallas equivalent of in-place workspace write).
            name, t = index
            self.workspace[name] = self.workspace[name].at[t].set(value)

    def __call__(self, workspace, **kwargs):
        assert workspace is not None, "[Agent.__call__] workspace must not be None"
        self.workspace = workspace
        self.forward(**kwargs)
        out = self.workspace
        self.workspace = None
        return out

    def forward(self, **kwargs):
        raise NotImplementedError


class _IdentityAgent(PallasAgent):
    """Smallest concrete Agent: reads variables and writes them back (base-class
    get/set semantics exercised end-to-end through the Pallas DMA kernel)."""

    def forward(self, **kwargs):
        self.set("obs_copy", self.get("obs"))
        self.set("obs_small_copy", self.get("obs_small"))
        self.set("step_copy", self.get("step"))   # scalar -> fast path


if __name__ == "__main__":
    key = jax.random.PRNGKey(0)
    k1, k2, k3 = jax.random.split(key, 3)
    # Workspace variables: (T, B, D) float32, deterministic init.
    obs = jax.random.normal(k1, (8, 2, 128), dtype=jnp.float32)        # 8 KiB, whole-array DMA
    obs_small = jax.random.normal(k2, (8, 2, 96), dtype=jnp.float32)   # 6 KiB, not %128 -> whole-array DMA
    obs_wide = jax.random.normal(k3, (64, 128), dtype=jnp.float32)     # 32 KiB, exercises chunked DMA path

    agent = _IdentityAgent(name="identity")
    workspace = {"obs": obs, "obs_small": obs_small, "step": jnp.float32(3.0)}
    workspace = agent(workspace)

    out = workspace["obs_copy"]
    out_small = workspace["obs_small_copy"]
    out_step = workspace["step_copy"]

    # Exercise the multi-chunk, multi-DMA-in-flight path at small scale
    # (chunk_bytes=4096 -> 8 chunks of 8 rows, 4 DMAs in flight).
    out_wide = agent_workspace_roundtrip(obs_wide, force_kernel=True, chunk_bytes=4096)

    jax.block_until_ready((out, out_small, out_step, out_wide))

    assert out.shape == obs.shape and out.dtype == obs.dtype
    assert bool(jnp.all(out == obs))
    assert out_small.shape == obs_small.shape and out_small.dtype == obs_small.dtype
    assert bool(jnp.all(out_small == obs_small))
    assert bool(out_step == jnp.float32(3.0))
    assert out_wide.shape == obs_wide.shape and bool(jnp.all(out_wide == obs_wide))
    print("KERNEL_OK")
</pallas_src>

<mosaic_0001>
module attributes {stable_mosaic.version = 11 : i64} {
  func.func @_whole_array_dma_kernel(%arg0: memref<8x2x128xf32, #tpu.memory_space<any>>, %arg1: memref<8x2x128xf32, #tpu.memory_space<any>>, %arg2: memref<1x!tpu.dma_semaphore, #tpu.memory_space<semaphore_mem>>) attributes {dimension_semantics = [], scalar_prefetch = 0 : i64, scratch_operands = 1 : i64, tpu.core_type = #tpu.core_type<tc>} {
    %c0_i32 = arith.constant 0 : i32
    %0 = tpu.memref_slice %arg2[%c0_i32] : memref<1x!tpu.dma_semaphore, #tpu.memory_space<semaphore_mem>> -> memref<1x!tpu.dma_semaphore, #tpu.memory_space<semaphore_mem>>
    %1 = tpu.memref_squeeze %0 : memref<1x!tpu.dma_semaphore, #tpu.memory_space<semaphore_mem>> -> memref<!tpu.dma_semaphore, #tpu.memory_space<semaphore_mem>>
    tpu.enqueue_dma source(%arg0 : memref<8x2x128xf32, #tpu.memory_space<any>>) target(%arg1 : memref<8x2x128xf32, #tpu.memory_space<any>>) target_semaphore(%1 : memref<!tpu.dma_semaphore, #tpu.memory_space<semaphore_mem>>)
    %c0_i32_0 = arith.constant 0 : i32
    %2 = tpu.memref_slice %arg2[%c0_i32_0] : memref<1x!tpu.dma_semaphore, #tpu.memory_space<semaphore_mem>> -> memref<1x!tpu.dma_semaphore, #tpu.memory_space<semaphore_mem>>
    %3 = tpu.memref_squeeze %2 : memref<1x!tpu.dma_semaphore, #tpu.memory_space<semaphore_mem>> -> memref<!tpu.dma_semaphore, #tpu.memory_space<semaphore_mem>>
    tpu.wait_dma2 semaphore(%3 : memref<!tpu.dma_semaphore, #tpu.memory_space<semaphore_mem>>) src(%arg0 : memref<8x2x128xf32, #tpu.memory_space<any>>) dst(%arg1 : memref<8x2x128xf32, #tpu.memory_space<any>>)
    return
  }
}

</mosaic_0001>

<llo_original>
// kernel: tpu_custom_call.1
$region0: #{tpu_custom_call.1}
  #allocation0 [shape = 'u32[]', space=smem, size = 0x4, offset = 0x4, fixed_abs, tag = 'smem constant byte address 0x4 - core index']
  #allocation1 [shape = 'u32[144,128]{1,0:T(1,128)}', space=vmem, size = 0x12000, scoped, tag = 'internal scratch']
  #allocation2 [shape = 's32[1]{0}', space=sflag, size = 0x4, scoped, tag = 'scratch operand']
  #allocation3 [shape = 's32[]', space=sflag, size = 0x4, offset = 0, fixed_abs, tag = 'sflag constant byte address 0x0 - dummy sync flag']
  #allocation4 [shape = 'u32[0]{0}', space=smem, size = 0, offset = 0, fixed_abs, tag = 'smem constant byte address 0x0 - null']
  %s0 = inlined_call_operand.hbm [shape: f32[8,2,128], index: 0, kind: input, shape index: {}]
  %s1 = inlined_call_operand.hbm [shape: f32[8,2,128], index: 1, kind: output, shape index: {}]
  %s2 = sld [smem:[#allocation0]]
  $region2: #{tpu_custom_call.1} parent=0
    _
  %s4 = ssub.s32 1, %s2
  %s5 = scalar_select 0, %s4, %s2
  %s7 = sshll.u32 1, 14
  %s8 = sxor.u32 4294967295, %s7
  %s11 = sshll.u32 3, 24
  %s12 = sxor.u32 4294967295, %s11
  %s13 = sand.u32 0, %s12
  %s15 = sor.u32 %s13, 0
  %18 = dma.general %s0, 256, %s1, [#allocation2], [#allocation3], [#allocation4], %s15, 0
  %s19 = smul.u32 8, 2
  %s20 = smul.u32 %s19, 1
  %s21 = sshll.u32 %s20, 4
  %22 = dma.done [#allocation2], %s21
  %23 = vsyncmov [#allocation2]
  %s24 = vpop.sfrf %23
  %p25 = scmp.eq.s32.totalorder %s24, 0
  %p26 = pneg %p25
  %28 = shalt.err (%p26)

</llo_original>
